<compile_context>
chip_gen: v5e
topology: v5e:2x2
jax: 0.10.0
libtpu: 0.0.40
codegen_flags: <defaults>
</compile_context>

<pallas_src>
import jax
import jax.numpy as jnp
import numpy as np
from jax.experimental import pallas as pl
from jax.experimental.pallas import tpu as pltpu

ROW_TILE_MAX = 1024  # rows per grid step for large batches


# --------------------------------------------------------------------------- kernel

def time_embed_kernel(st_ref, const_ref, wt_ref, b_ref, out_ref):
    """Fused sinusoidal time embedding + Linear for one tile of batch rows.

    st_ref    : (T, 2)        column 0 = t, column 1 = s
    const_ref : (3, 4F)       row 0 = ang4, row 1 = sel*ang4, row 2 = phase shift
    wt_ref    : (4F, outdim)  transposed lin1 weight
    b_ref     : (1, outdim)   lin1 bias
    out_ref   : (T, outdim)
    """
    st = st_ref[...]                      # (T, 2)
    t = st[:, 0:1]                        # (T, 1)
    s = st[:, 1:2]                        # (T, 1)

    consts = const_ref[...]               # (3, 4F)
    ang_t = consts[0:1, :]                # frequencies, tiled x4
    ang_s = consts[1:2, :]                # frequencies masked to (t-s) quadrants
    shift = consts[2:3, :]                # +pi/2 on the cos quadrants

    # Lane-dense (T, 4F) embedding: sin/cos of both phase sets in one EUP pass.
    phase = t * ang_t - s * ang_s + shift
    embed = jnp.sin(phase)

    acc = jnp.dot(embed, wt_ref[...], preferred_element_type=jnp.float32)
    out_ref[...] = (acc + b_ref[...]).astype(out_ref.dtype)


# --------------------------------------------------------------------------- wrapper

def _round_up(x, m):
    return (x + m - 1) // m * m


def time_embedding_init(weight, bias, *, freqs):
    """One-time parameter prep.  weight: (outdim, 4*freqs) PyTorch Linear layout."""
    assert freqs >= 2, "freqs must be >= 2 (reference divides by freqs - 1)"
    outdim, in_dim = weight.shape
    assert in_dim == 4 * freqs

    wt = jnp.transpose(jnp.asarray(weight, jnp.float32))          # (4F, outdim)
    b2 = jnp.asarray(bias, jnp.float32).reshape(1, outdim)        # (1, outdim)

    ang = jnp.exp(-jnp.arange(freqs, dtype=jnp.float32) / jnp.float32(freqs - 1))
    ang4 = jnp.tile(ang, 4)                                               # (4F,)
    sel = jnp.tile(jnp.repeat(jnp.array([0.0, 1.0], jnp.float32), freqs), 2)
    shift = jnp.repeat(jnp.array([0.0, jnp.pi / 2], jnp.float32), 2 * freqs)
    consts = jnp.stack([ang4, sel * ang4, shift], axis=0)                 # (3, 4F)

    return dict(wt=wt, bias=b2, consts=consts)


@jax.jit
def time_embedding_apply(prepared, s, t):
    """prepared: output of time_embedding_init.  s, t: (B,) -> (B, outdim)."""
    wt = prepared["wt"]
    b2 = prepared["bias"]
    consts = prepared["consts"]
    outdim = wt.shape[1]
    B = s.shape[0]

    # Row tiling: minimize padding; ensure >=2 grid steps once the batch is large
    # enough so both v7x TensorCores get work ("parallel" grid axis).
    bp8 = _round_up(B, 8)
    n_steps = max(pl.cdiv(bp8, ROW_TILE_MAX), 2 if bp8 >= 512 else 1)
    tile = _round_up(pl.cdiv(bp8, n_steps), 8)
    bp = tile * n_steps
    pad = bp - B

    st = jnp.stack([t.astype(jnp.float32), s.astype(jnp.float32)], axis=1)  # (B, 2)
    st = jnp.pad(st, ((0, pad), (0, 0)))

    def full_spec(a):
        nd = a.ndim
        return pl.BlockSpec(a.shape, lambda i, _nd=nd: (0,) * _nd)

    out = pl.pallas_call(
        time_embed_kernel,
        out_shape=jax.ShapeDtypeStruct((bp, outdim), jnp.float32),
        grid=(n_steps,),
        in_specs=[pl.BlockSpec((tile, 2), lambda i: (i, 0)),
                  full_spec(consts), full_spec(wt), full_spec(b2)],
        out_specs=pl.BlockSpec((tile, outdim), lambda i: (i, 0)),
        compiler_params=pltpu.CompilerParams(
            dimension_semantics=("parallel",)),
    )(st, consts, wt, b2)

    return out[:B]


# --------------------------------------------------------------------------- reference

def time_embedding_ref(weight, bias, s, t, *, freqs):
    ang = jnp.exp(-jnp.arange(freqs, dtype=jnp.float32) / jnp.float32(freqs - 1))
    phases = jnp.concatenate([t[:, None] * ang[None, :],
                              (t - s)[:, None] * ang[None, :]], axis=1)
    embed = jnp.concatenate([jnp.sin(phases), jnp.cos(phases)], axis=1)
    return embed @ jnp.transpose(weight) + bias


# --------------------------------------------------------------------------- main

if __name__ == "__main__":
    key = jax.random.PRNGKey(0)
    B, freqs, outdim = 8, 32, 128          # 4*freqs = 128 -> lane-dense embed & output

    kw, kb, ks, kt = jax.random.split(key, 4)
    weight = (jax.random.normal(kw, (outdim, 4 * freqs), jnp.float32)
              / jnp.sqrt(jnp.float32(4 * freqs)))
    bias = jax.random.normal(kb, (outdim,), jnp.float32) * 0.01
    s = jax.random.uniform(ks, (B,), jnp.float32)
    t = jax.random.uniform(kt, (B,), jnp.float32)

    prepared = time_embedding_init(weight, bias, freqs=freqs)
    out = time_embedding_apply(prepared, s, t)
    jax.block_until_ready(out)

    ref = time_embedding_ref(weight, bias, s, t, freqs=freqs)
    np.testing.assert_allclose(np.asarray(out), np.asarray(ref), rtol=1e-5, atol=1e-5)
    assert out.shape == (B, outdim)
    print("KERNEL_OK")
</pallas_src>

<mosaic_0001>
module attributes {stable_mosaic.version = 11 : i64} {
  func.func @time_embed_kernel(%arg0: i32, %arg1: memref<8x2xf32, #tpu.memory_space<vmem>>, %arg2: memref<3x128xf32, #tpu.memory_space<vmem>>, %arg3: memref<128x128xf32, #tpu.memory_space<vmem>>, %arg4: memref<1x128xf32, #tpu.memory_space<vmem>>, %arg5: memref<8x128xf32, #tpu.memory_space<vmem>>) attributes {dimension_semantics = [#tpu.dimension_semantics<parallel>], iteration_bounds = array<i64: 1>, scalar_prefetch = 0 : i64, scratch_operands = 0 : i64, tpu.core_type = #tpu.core_type<tc>, window_params = [{transform_indices = @transform_0, window_bounds = array<i64: 8, 2>}, {pipeline_mode = #tpu.pipeline_mode<synchronous>, transform_indices = @transform_1, window_bounds = array<i64: 3, 128>}, {pipeline_mode = #tpu.pipeline_mode<synchronous>, transform_indices = @transform_2, window_bounds = array<i64: 128, 128>}, {pipeline_mode = #tpu.pipeline_mode<synchronous>, transform_indices = @transform_3, window_bounds = array<i64: 1, 128>}, {transform_indices = @transform_4, window_bounds = array<i64: 8, 128>}]} {
    %c0 = arith.constant 0 : index
    %c0_0 = arith.constant 0 : index
    %0 = vector.load %arg1[%c0, %c0_0] : memref<8x2xf32, #tpu.memory_space<vmem>>, vector<8x2xf32>
    %1 = vector.extract_strided_slice %0 {offsets = [0, 0], sizes = [8, 1], strides = [1, 1]} : vector<8x2xf32> to vector<8x1xf32>
    %2 = vector.extract_strided_slice %0 {offsets = [0, 1], sizes = [8, 1], strides = [1, 1]} : vector<8x2xf32> to vector<8x1xf32>
    %c0_1 = arith.constant 0 : index
    %c0_2 = arith.constant 0 : index
    %3 = vector.load %arg2[%c0_1, %c0_2] : memref<3x128xf32, #tpu.memory_space<vmem>>, vector<3x128xf32>
    %4 = vector.extract_strided_slice %3 {offsets = [0, 0], sizes = [1, 128], strides = [1, 1]} : vector<3x128xf32> to vector<1x128xf32>
    %5 = vector.extract_strided_slice %3 {offsets = [1, 0], sizes = [1, 128], strides = [1, 1]} : vector<3x128xf32> to vector<1x128xf32>
    %6 = vector.extract_strided_slice %3 {offsets = [2, 0], sizes = [1, 128], strides = [1, 1]} : vector<3x128xf32> to vector<1x128xf32>
    %7 = vector.broadcast %1 : vector<8x1xf32> to vector<8x128xf32>
    %8 = vector.broadcast %4 : vector<1x128xf32> to vector<8x128xf32>
    %9 = arith.mulf %7, %8 : vector<8x128xf32>
    %10 = vector.broadcast %2 : vector<8x1xf32> to vector<8x128xf32>
    %11 = vector.broadcast %5 : vector<1x128xf32> to vector<8x128xf32>
    %12 = arith.mulf %10, %11 : vector<8x128xf32>
    %13 = arith.subf %9, %12 : vector<8x128xf32>
    %14 = vector.broadcast %6 : vector<1x128xf32> to vector<8x128xf32>
    %15 = arith.addf %13, %14 : vector<8x128xf32>
    %16 = math.sin %15 : vector<8x128xf32>
    %c0_3 = arith.constant 0 : index
    %c0_4 = arith.constant 0 : index
    %17 = vector.load %arg3[%c0_3, %c0_4] : memref<128x128xf32, #tpu.memory_space<vmem>>, vector<128x128xf32>
    %cst = arith.constant dense<0.000000e+00> : vector<8x128xf32>
    %18 = tpu.matmul %16, %17, %cst {dimension_numbers = #tpu.dot_dimension_numbers<[1], [0], [0], [1], [0, 0, 1, 1], [], []>} : vector<8x128xf32>, vector<128x128xf32>, vector<8x128xf32> -> vector<8x128xf32>
    %c0_5 = arith.constant 0 : index
    %c0_6 = arith.constant 0 : index
    %19 = vector.load %arg4[%c0_5, %c0_6] : memref<1x128xf32, #tpu.memory_space<vmem>>, vector<1x128xf32>
    %20 = vector.broadcast %19 : vector<1x128xf32> to vector<8x128xf32>
    %21 = arith.addf %18, %20 : vector<8x128xf32>
    %c0_7 = arith.constant 0 : index
    %c0_8 = arith.constant 0 : index
    %22 = vector.load %arg5[%c0_7, %c0_8] : memref<8x128xf32, #tpu.memory_space<vmem>>, vector<8x128xf32>
    tpu.vector_store %arg5[%c0_7, %c0_8], %21 {strides = array<i32>} : memref<8x128xf32, #tpu.memory_space<vmem>>, vector<8x128xf32>,
    return
  }
  func.func @transform_0(%arg0: i32) -> (i32, i32) {
    %c0_i32 = arith.constant 0 : i32
    %c0_i32_0 = arith.constant 0 : i32
    return %arg0, %c0_i32 : i32, i32
  }
  func.func @transform_1(%arg0: i32) -> (i32, i32) {
    %c0_i32 = arith.constant 0 : i32
    %c0_i32_0 = arith.constant 0 : i32
    %c0_i32_1 = arith.constant 0 : i32
    return %c0_i32, %c0_i32_0 : i32, i32
  }
  func.func @transform_2(%arg0: i32) -> (i32, i32) {
    %c0_i32 = arith.constant 0 : i32
    %c0_i32_0 = arith.constant 0 : i32
    %c0_i32_1 = arith.constant 0 : i32
    return %c0_i32, %c0_i32_0 : i32, i32
  }
  func.func @transform_3(%arg0: i32) -> (i32, i32) {
    %c0_i32 = arith.constant 0 : i32
    %c0_i32_0 = arith.constant 0 : i32
    %c0_i32_1 = arith.constant 0 : i32
    return %c0_i32, %c0_i32_0 : i32, i32
  }
  func.func @transform_4(%arg0: i32) -> (i32, i32) {
    %c0_i32 = arith.constant 0 : i32
    %c0_i32_0 = arith.constant 0 : i32
    return %arg0, %c0_i32 : i32, i32
  }
}

</mosaic_0001>

<llo_original>
// kernel: time_embedding_apply.1
$region0: #{time_embedding_apply.1}
  #allocation0 [shape = 'u32[]', space=smem, size = 0x4, offset = 0x4, fixed_abs, tag = 'smem constant byte address 0x4 - core index']
  #allocation1 [shape = 'u32[72,128]{1,0:T(1,128)}', space=vmem, size = 0x9000, scoped, tag = 'internal scratch']
  %s0 = inlined_call_operand.vmem [shape: f32[8,2], index: 0, kind: input, shape index: {}]
  %s1 = inlined_call_operand.vmem [shape: f32[3,128], index: 1, kind: input, shape index: {}]
  %s2 = inlined_call_operand.hbm [shape: f32[128,128], index: 2, kind: input, shape index: {}]
  %s3 = inlined_call_operand.vmem [shape: f32[1,128], index: 3, kind: input, shape index: {}]
  %s4 = inlined_call_operand.hbm [shape: f32[8,128], index: 4, kind: output, shape index: {}]
  %s5 = sld [smem:[#allocation0]]
  $region30: #{time_embedding_apply.1} parent=0
    _
  %s7 = ssub.s32 1, %s5
  %s8 = scalar_select 0, %s7, %s5
  $region1: #{time_embedding_apply.1} parent=0
    #allocation2 [shape = 'u8[65536]{0}', space=vmem, size = 0x10000, scoped, tag = 'input window, operand 2, single buffered']
    #allocation3 [shape = 's32[1]{0}', space=sflag, size = 0x4, scoped, tag = 'scoped memory for time_embedding_apply.1']
    #allocation4 [shape = 's32[1]{0}', space=sflag, size = 0x4, scoped, tag = 'scoped memory for time_embedding_apply.1']
    #allocation5 [shape = 'u8[4096]{0}', space=vmem, size = 0x1000, scoped, tag = 'output window, operand 0, single buffered']
    %9 = vsyncpa [#allocation3], 0
    %10 = vsyncpa [#allocation4], 0
    // Predicated region
    $region2: #{time_embedding_apply.1} parent=1 // pred_check
      _
    $region3: #{time_embedding_apply.1} parent=1 // pred_check_branch
      %12 = sbr.rel (0) target = $region5
    $region4: #{time_embedding_apply.1} parent=1 // pred_region
      _
    $region5: #{time_embedding_apply.1} parent=1 // pred_fallthru
      _
    // Predicated region
    $region6: #{time_embedding_apply.1} parent=1 // pred_check
      _
    $region7: #{time_embedding_apply.1} parent=1 // pred_check_branch
      %14 = sbr.rel (0) target = $region9
    $region8: #{time_embedding_apply.1} parent=1 // pred_region
      _
    $region9: #{time_embedding_apply.1} parent=1 // pred_fallthru
      _
    // Predicated region
    $region10: #{time_embedding_apply.1} parent=1 // pred_check
      _
    $region11: #{time_embedding_apply.1} parent=1 // pred_check_branch
      %16 = sbr.rel (0) target = $region13
    $region12: #{time_embedding_apply.1} parent=1 // pred_region
      %18 = vsyncadd [#allocation3], 0
      %s19 = sshll.u32 %s2, 4
      %s20 = int_to_ptr.hbm [resolvable:$true] %s19
      %s21 = sshll.u32 [#allocation2], 4
      %s22 = int_to_ptr.vmem [resolvable:$true] %s21
      %27 = dma.hbm_to_vmem [thread:$0]  %s20, 2048, %s22, [#allocation3], 128, 128, 8
    $region13: #{time_embedding_apply.1} parent=1 // pred_fallthru
      _
    // Predicated region
    $region14: #{time_embedding_apply.1} parent=1 // pred_check
      _
    $region15: #{time_embedding_apply.1} parent=1 // pred_check_branch
      %29 = sbr.rel (0) target = $region17
    $region16: #{time_embedding_apply.1} parent=1 // pred_region
      _
    $region17: #{time_embedding_apply.1} parent=1 // pred_fallthru
      _
    // Predicated region
    $region18: #{time_embedding_apply.1} parent=1 // pred_check
      _
    $region19: #{time_embedding_apply.1} parent=1 // pred_check_branch
      %31 = sbr.rel (0) target = $region21
    $region20: #{time_embedding_apply.1} parent=1 // pred_region
      %33 = dma.done [#allocation3], 2048
    $region21: #{time_embedding_apply.1} parent=1 // pred_fallthru
      _
    %v34 = vld [vmem:[%s0] sm:$0xff]
    %v35 = vld [vmem:[%s1] sm:$0x7]
    %37 = vset.pattern.permute.xlu0 0
    %38 = vperm.xlu0 %37, %v34
    %v39 = vpop.permute.xlu0 %38
    %v41 = vperm.slane %v35, 0
    %v42 = vmul.f32 %v39, %v41
    %43 = vset.pattern.permute.xlu0 1
    %44 = vperm.xlu0 %43, %v34
    %v45 = vpop.permute.xlu0 %44
    %v47 = vperm.slane %v35, 1
    %v48 = vmul.f32 %v45, %v47
    %v49 = vsub.f32 %v42, %v48
    %v50 = vperm.slane %v35, 2
    %v51 = vadd.f32 %v49, %v50
    %v52 = vand.u32 2147483647, %v51
    %vm53 = vcmp.le.f32.partialorder %v52, 0.7853982
    %vm54 = vcmp.lt.s32.totalorder %v51, 0
    %v55 = vand.u32 %v51, 2139095040
    %v56 = vshrl.u32 %v55, 23
    %v57 = vsub.s32 %v56, 127
    %v58 = vand.u32 2147483647, %v51
    %v59 = vand.u32 %v58, 8388607
    %v60 = vor.u32 %v59, 8388608
    %v61 = vsub.s32 0, %v60
    %v62 = vadd.s32 %v57, 1
    %vm63 = vcmp.gt.s32.totalorder %v62, 0
    %v64 = vsel %vm63, %v62, 0
    %v65 = vshrl.u32 %v64, 5
    %v66 = vand.u32 %v64, 31
    %v67 = vsub.s32 32, %v66
    %v68 = vshrl.u32 683565275, %v67
    %v69 = vshll.u32 683565275, %v66
    %v70 = vshrl.u32 2475754826, %v67
    %v71 = vor.u32 %v69, %v70
    %v72 = vshll.u32 2475754826, %v66
    %v73 = vshrl.u32 2131351028, %v67
    %v74 = vor.u32 %v72, %v73
    %v75 = vshll.u32 2131351028, %v66
    %v76 = vshrl.u32 2102212464, %v67
    %v77 = vor.u32 %v75, %v76
    %v78 = vshll.u32 2102212464, %v66
    %v79 = vshrl.u32 920167782, %v67
    %v80 = vor.u32 %v78, %v79
    %v81 = vshll.u32 920167782, %v66
    %v82 = vshrl.u32 1326507024, %v67
    %v83 = vor.u32 %v81, %v82
    %vm84 = vcmp.lt.s32.totalorder %v65, 1
    %vm85 = vcmp.lt.s32.totalorder %v65, 2
    %vm86 = vcmp.lt.s32.totalorder %v65, 3
    %vm87 = vcmp.lt.s32.totalorder %v65, 4
    %v88 = vsel %vm84, %v68, %v71
    %v89 = vsel %vm87, %v77, 2102212464
    %v90 = vsel %vm86, %v74, %v89
    %v91 = vsel %vm85, %v88, %v90
    %v92 = vsel %vm84, %v71, %v74
    %v93 = vsel %vm87, %v80, 920167782
    %v94 = vsel %vm86, %v77, %v93
    %v95 = vsel %vm85, %v92, %v94
    %v96 = vsel %vm84, %v74, %v77
    %v97 = vsel %vm87, %v83, 1326507024
    %v98 = vsel %vm86, %v80, %v97
    %v99 = vsel %vm85, %v96, %v98
    %v100 = vshll.u32 %v60, 8
    %v101 = vand.u32 %v100, 65535
    %v102 = vshrl.u32 %v100, 16
    %v103 = vand.u32 %v99, 65535
    %v104 = vshrl.u32 %v99, 16
    %v105 = vmul.u32 %v101, %v103
    %v106 = vmul.u32 %v101, %v104
    %v107 = vmul.u32 %v102, %v103
    %v108 = vmul.u32 %v102, %v104
    %v109 = vshll.u32 %v106, 16
    %v110 = vshrl.u32 %v106, 16
    %v111 = vshll.u32 %v107, 16
    %v112 = vshrl.u32 %v107, 16
    %vm113 = vc.u32 %v105, %v109
    %v114 = vsel %vm113, 1, 0
    %v115 = vadd.s32 %v105, %v109
    %v116 = vadd.s32 %v108, %v114
    %vm117 = vc.u32 %v115, %v111
    %v118 = vsel %vm117, 1, 0
    %v119 = vadd.s32 %v115, %v111
    %v120 = vadd.s32 %v116, %v118
    %v121 = vadd.s32 %v120, %v110
    %v122 = vadd.s32 %v121, %v112
    %v123 = vand.u32 %v100, 65535
    %v124 = vshrl.u32 %v100, 16
    %v125 = vand.u32 %v95, 65535
    %v126 = vshrl.u32 %v95, 16
    %v127 = vmul.u32 %v123, %v125
    %v128 = vmul.u32 %v123, %v126
    %v129 = vmul.u32 %v124, %v125
    %v130 = vmul.u32 %v124, %v126
    %v131 = vshll.u32 %v128, 16
    %v132 = vshrl.u32 %v128, 16
    %v133 = vshll.u32 %v129, 16
    %v134 = vshrl.u32 %v129, 16
    %vm135 = vc.u32 %v127, %v131
    %v136 = vsel %vm135, 1, 0
    %v137 = vadd.s32 %v127, %v131
    %v138 = vadd.s32 %v130, %v136
    %vm139 = vc.u32 %v137, %v133
    %v140 = vsel %vm139, 1, 0
    %v141 = vadd.s32 %v137, %v133
    %v142 = vadd.s32 %v138, %v140
    %v143 = vadd.s32 %v142, %v132
    %v144 = vadd.s32 %v143, %v134
    %v145 = vmul.u32 %v100, %v91
    %v146 = vadd.s32 %v122, %v141
    %vm147 = vc.u32 %v122, %v141
    %v148 = vadd.s32 %v144, 1
    %v149 = vsel %vm147, %v148, %v144
    %v150 = vadd.s32 %v145, %v149
    %v151 = vadd.s32 %v150, 536870912
    %v152 = vshrl.u32 %v151, 30
    %v153 = vshll.u32 %v152, 30
    %v154 = vsub.s32 %v150, %v153
    %vm155 = vcmp.lt.s32.totalorder %v154, 0
    %v156 = vsub.s32 0, %v154
    %v157 = vsel %vm155, %v156, %v154
    %v158 = vclz %v157
    %v159 = vsub.s32 %v158, 2
    %vm160 = vcmp.gt.s32.totalorder 0, %v159
    %v161 = vsel %vm160, 0, %v159
    %v162 = vsub.s32 32, %v161
    %v163 = vshll.u32 %v154, %v161
    %v164 = vshrl.u32 %v146, %v162
    %v165 = vor.u32 %v163, %v164
    %v166 = vsub.s32 4294967266, %v161
    %v167 = vadd.s32 %v166, 127
    %v168 = vshll.u32 %v167, 23
    %v169 = vor.u32 4788187, %v168
    %v170 = vand.u32 2147483647, %v169
    %v172 = vcvt.s32.f32 %v165
    %v173 = vmul.f32 %v172, %v170
    %v174 = vxor.u32 %v173, 2147483648
    %v175 = vsel %vm54, %v174, %v173
    %v176 = vsub.s32 4, %v152
    %v177 = vsel %vm54, %v176, %v152
    %v178 = vsel %vm53, %v51, %v175
    %v179 = vsel %vm53, 0, %v177
    %v180 = vmul.f32 %v178, %v178
    %v181 = vmul.f32 %v180, -0.001358992
    %v182 = vadd.f32 %v181, 0.041655596
    %v183 = vmul.f32 %v180, %v182
    %v184 = vadd.f32 %v183, -0.4999988
    %v185 = vmul.f32 %v180, %v184
    %v186 = vadd.f32 1.0, %v185
    %v187 = vmul.f32 %v178, %v178
    %v188 = vmul.f32 %v187, -0.00019511016
    %v189 = vadd.f32 %v188, 0.008332121
    %v190 = vmul.f32 %v187, %v189
    %v191 = vadd.f32 %v190, -0.16666654
    %v192 = vmul.f32 %v187, %v191
    %v193 = vadd.f32 %v192, 1.0
    %v194 = vmul.f32 %v193, %v178
    %vm195 = vweird.f32 %v51
    %v196 = vadd.s32 %v179, 3
    %v197 = vand.u32 %v196, 3
    %vm198 = vcmp.lt.s32.totalorder %v197, 2
    %vm199 = vcmp.eq.s32.totalorder %v197, 0
    %v200 = vxor.u32 %v194, 2147483648
    %v201 = vsel %vm199, %v186, %v200
    %vm202 = vcmp.eq.s32.totalorder %v197, 2
    %v203 = vxor.u32 %v186, 2147483648
    %v204 = vsel %vm202, %v203, %v194
    %v205 = vsel %vm198, %v201, %v204
    %v206 = vsel %vm195, nan, %v205
    %v207 = vld [vmem:[#allocation2] sm:$0xff]
    %v208 = vld [vmem:[#allocation2 + $0x8] sm:$0xff]
    %v209 = vld [vmem:[#allocation2 + $0x10] sm:$0xff]
    %v210 = vld [vmem:[#allocation2 + $0x18] sm:$0xff]
    %v211 = vld [vmem:[#allocation2 + $0x20] sm:$0xff]
    %v212 = vld [vmem:[#allocation2 + $0x28] sm:$0xff]
    %v213 = vld [vmem:[#allocation2 + $0x30] sm:$0xff]
    %v214 = vld [vmem:[#allocation2 + $0x38] sm:$0xff]
    %v215 = vld [vmem:[#allocation2 + $0x40] sm:$0xff]
    %v216 = vld [vmem:[#allocation2 + $0x48] sm:$0xff]
    %v217 = vld [vmem:[#allocation2 + $0x50] sm:$0xff]
    %v218 = vld [vmem:[#allocation2 + $0x58] sm:$0xff]
    %v219 = vld [vmem:[#allocation2 + $0x60] sm:$0xff]
    %v220 = vld [vmem:[#allocation2 + $0x68] sm:$0xff]
    %v221 = vld [vmem:[#allocation2 + $0x70] sm:$0xff]
    %v222 = vld [vmem:[#allocation2 + $0x78] sm:$0xff]
    %v223 = vld [vmem:[%s3] sm:$0x1]
    %v225 = vperm.slane %v223, 0
    %227 = vmatpush.msra.mxu0 %v222
    %228 = vmatpush.msra.mxu0 %v221
    %229 = vmatpush.msra.mxu0 %v220
    %230 = vmatpush.msra.mxu0 %v219
    %231 = vmatpush.msra.mxu0 %v218
    %232 = vmatpush.msra.mxu0 %v217
    %233 = vmatpush.msra.mxu0 %v216
    %234 = vmatpush.msra.mxu0 %v215
    %235 = vmatpush.msra.mxu0 %v214
    %236 = vmatpush.msra.mxu0 %v213
    %237 = vmatpush.msra.mxu0 %v212
    %238 = vmatpush.msra.mxu0 %v211
    %239 = vmatpush.msra.mxu0 %v210
    %240 = vmatpush.msra.mxu0 %v209
    %241 = vmatpush.msra.mxu0 %v208
    %242 = vmatpush.msra.mxu0 %v207
    %243 = vmatmul.f32.gmra.mxu0 %v206
    %v244 = vpop.f32.mrf.mxu0
    %v245 = vadd.f32 %v225, %v244
    %246 = vdwg.mxu0
    %247 = vst [vmem:[#allocation5] sm:$0xff] %v245
    // Predicated region
    $region22: #{time_embedding_apply.1} parent=1 // pred_check
      _
    $region23: #{time_embedding_apply.1} parent=1 // pred_check_branch
      %249 = sbr.rel (0) target = $region25
    $region24: #{time_embedding_apply.1} parent=1 // pred_region
      %251 = vsyncadd [#allocation4], 0
      %s253 = sshll.u32 [#allocation5], 4
      %s254 = int_to_ptr.vmem [resolvable:$true] %s253
      %s255 = sshll.u32 %s4, 4
      %s256 = int_to_ptr.hbm [resolvable:$true] %s255
      %258 = dma.vmem_to_hbm [thread:$0]  %s254, 128, %s256, [#allocation4]
    $region25: #{time_embedding_apply.1} parent=1 // pred_fallthru
      _
    // Predicated region
    $region26: #{time_embedding_apply.1} parent=1 // pred_check
      _
    $region27: #{time_embedding_apply.1} parent=1 // pred_check_branch
      %260 = sbr.rel (0) target = $region29
    $region28: #{time_embedding_apply.1} parent=1 // pred_region
      %262 = dma.done [#allocation4], 128
    $region29: #{time_embedding_apply.1} parent=1 // pred_fallthru
      _
    %263 = vsyncpa [#allocation3], 1
    %264 = vsyncpa [#allocation4], 1

</llo_original>
